<compile_context>
chip_gen: v5e
topology: v5e:2x2
jax: 0.10.0
libtpu: 0.0.40
codegen_flags: <defaults>
</compile_context>

<pallas_src>
import jax
import jax.numpy as jnp
from jax.experimental import pallas as pl
from jax.experimental.pallas import tpu as pltpu


# ---------------------------------------------------------------------------
# Kernel
# ---------------------------------------------------------------------------
def _masked_gru_kernel(
    x_ref, h_ref, delta_ref, m_ref,     # [TB, H] f32, f32, bf16, bf16
    ptab_ref,                           # [16, H] f32 packed small params
    wmu_ref, wgamma_ref,                # [H, H] bf16 (transposed Linear weights)
    out_ref,                            # [TB, H] f32
):
    x = x_ref[...]
    h = h_ref[...]
    delta = delta_ref[...]                          # bf16, consumed only by MXU
    m = m_ref[...].astype(jnp.float32)              # exact 0/1 -> f32 for decay math

    # Packed parameter table rows:
    #   0..5 : diag(Wir), diag(Wiz), diag(Win), diag(Whr), diag(Whz), diag(Whn)
    #   6..8 : b_ir, b_iz, b_in
    #   9    : b_mu
    #   10   : b_gamma
    d_ir = ptab_ref[0:1, :]
    d_iz = ptab_ref[1:2, :]
    d_in = ptab_ref[2:3, :]
    d_hr = ptab_ref[3:4, :]
    d_hz = ptab_ref[4:5, :]
    d_hn = ptab_ref[5:6, :]
    b_ir = ptab_ref[6:7, :]
    b_iz = ptab_ref[7:8, :]
    b_in = ptab_ref[8:9, :]
    b_mu = ptab_ref[9:10, :]
    b_ga = ptab_ref[10:11, :]

    # Diagonal Linears collapse to VPU element-wise multiplies.
    r_t = jax.nn.sigmoid(x * d_ir + b_ir + h * d_hr)
    z_t = jax.nn.sigmoid(x * d_iz + b_iz + h * d_hz)
    n_t = jnp.tanh(x * d_in + b_in + (h * r_t) * d_hn)
    h_t = (1.0 - z_t) * h + z_t * n_t

    # The only dense matmuls: W_mu, W_gamma (bf16 operands, f32 accumulation).
    mu_t = jnp.dot(x.astype(jnp.bfloat16), wmu_ref[...],
                   preferred_element_type=jnp.float32) + b_mu
    gamma_t = jnp.dot(delta, wgamma_ref[...],
                      preferred_element_type=jnp.float32) + b_ga

    h_hat_t = mu_t + (h_t - mu_t) * jnp.exp(-gamma_t * m)
    out_ref[...] = h_hat_t.astype(out_ref.dtype)


# ---------------------------------------------------------------------------
# Wrapper
# ---------------------------------------------------------------------------
_VMEM_TILE_BUDGET = 40 * 1024 * 1024   # conservative across v5e/v6e/v7x (v7x: 64 MiB phys)
_VMEM_LIMIT_BYTES = 48 * 1024 * 1024   # > scoped defaults (16 MiB v5e / 32 MiB v6e,v7x)


def _round_up(n, m):
    return (n + m - 1) // m * m


def _choose_tb(B, H):
    """Batch tile: large for DMA amortization, VMEM-aware, >=2 grid steps when possible."""
    b8 = _round_up(B, 8)
    # Per batch-row VMEM bytes, double-buffered: x f32 + h f32 + out f32 + delta bf16 + m bf16.
    per_row = 2 * H * (4 + 4 + 4 + 2 + 2)
    const_bytes = 2 * (H * H * 2) + 16 * H * 4      # single-buffered weights + param table
    fit = max(8, int((_VMEM_TILE_BUDGET - const_bytes) // per_row) // 8 * 8)
    tb_cap = min(512, fit)
    if b8 <= tb_cap:
        # Whole batch fits one tile; split in two (8-aligned) so a second TC gets work.
        if b8 >= 16:
            return _round_up(b8 // 2, 8)
        return b8
    # Large batch: prefer 512/256-row tiles (fills v6e/v7x 256-row MXU, best DMA efficiency).
    for cand in (512, 384, 256, 128):
        if cand <= tb_cap:
            return cand
    return tb_cap


@jax.jit
def masked_gru_cell(x_t, h_t_minus_1, delta_t, m_t, params):
    """Forward pass of MaskedGRUCell. params: kernel-ready dict from init_params()."""
    B, H = h_t_minus_1.shape
    I = x_t.shape[-1]
    assert I == H, "identity mask requires input_size == hidden_size"

    TB = _choose_tb(B, H)
    Bp = _round_up(B, TB)

    # Shave HBM read bytes: delta feeds only the bf16 matmul; m is exactly 0/1.
    x_t = x_t.astype(jnp.float32)
    h_t_minus_1 = h_t_minus_1.astype(jnp.float32)
    delta_t = delta_t.astype(jnp.bfloat16)
    m_t = m_t.astype(jnp.bfloat16)

    if Bp != B:
        pad = ((0, Bp - B), (0, 0))
        x_t = jnp.pad(x_t, pad)
        h_t_minus_1 = jnp.pad(h_t_minus_1, pad)
        delta_t = jnp.pad(delta_t, pad)
        m_t = jnp.pad(m_t, pad)

    act_spec = pl.BlockSpec((TB, H), lambda b: (b, 0))

    def const_spec(shape):
        # Full array, constant block index -> VMEM-resident; single-buffer it.
        return pl.BlockSpec(shape, lambda b: (0, 0), pipeline_mode=pl.Buffered(1))

    out = pl.pallas_call(
        _masked_gru_kernel,
        out_shape=jax.ShapeDtypeStruct((Bp, H), jnp.float32),
        grid=(Bp // TB,),
        in_specs=[
            act_spec, act_spec, act_spec, act_spec,
            const_spec((16, H)),
            const_spec((I, H)), const_spec((I, H)),
        ],
        out_specs=act_spec,
        compiler_params=pltpu.CompilerParams(
            dimension_semantics=("parallel",),
            vmem_limit_bytes=_VMEM_LIMIT_BYTES,
        ),
    )(x_t, h_t_minus_1, delta_t, m_t,
      params["ptab"], params["wmu"], params["wgamma"])

    return out[:B]


# ---------------------------------------------------------------------------
# Parameter init (mimics nn.Linear defaults, then apply_mask() == keep diagonals)
# ---------------------------------------------------------------------------
def init_params(key, input_size, hidden_size):
    assert input_size == hidden_size, "identity mask requires input_size == hidden_size"
    I, H = input_size, hidden_size

    def linear(k, fan_in, fan_out, bias=True):
        kw, kb = jax.random.split(k)
        bound = 1.0 / jnp.sqrt(fan_in)
        w = jax.random.uniform(kw, (fan_out, fan_in), jnp.float32, -bound, bound)
        b = (jax.random.uniform(kb, (fan_out,), jnp.float32, -bound, bound)
             if bias else None)
        return w, b

    ks = jax.random.split(key, 8)
    wir, bir = linear(ks[0], I, H)
    wiz, biz = linear(ks[1], I, H)
    win, bin_ = linear(ks[2], I, H)
    whr, _ = linear(ks[3], H, H, bias=False)   # torch module: bias=False
    whz, _ = linear(ks[4], H, H, bias=False)
    whn, _ = linear(ks[5], H, H, bias=False)
    wmu, bmu = linear(ks[6], I, H)
    wgamma, bgamma = linear(ks[7], I, H)

    # apply_mask(): W *= eye(H)  =>  only the diagonal survives.
    small = jnp.stack([
        jnp.diagonal(wir), jnp.diagonal(wiz), jnp.diagonal(win),
        jnp.diagonal(whr), jnp.diagonal(whz), jnp.diagonal(whn),
        bir, biz, bin_, bmu, bgamma,
    ]).astype(jnp.float32)                               # [11, H]
    ptab = jnp.concatenate(
        [small, jnp.zeros((16 - small.shape[0], H), jnp.float32)], axis=0)  # [16, H]

    return {
        "ptab": ptab,                                    # [16, H] f32
        "wmu": wmu.T.astype(jnp.bfloat16),               # [I, H] bf16
        "wgamma": wgamma.T.astype(jnp.bfloat16),         # [I, H] bf16
    }


# ---------------------------------------------------------------------------
# Pure-JAX reference (identical semantics, incl. bf16 matmul operands)
# ---------------------------------------------------------------------------
def masked_gru_ref(x_t, h, delta_t, m_t, params):
    p = params["ptab"]
    r = jax.nn.sigmoid(x_t * p[0] + p[6] + h * p[3])
    z = jax.nn.sigmoid(x_t * p[1] + p[7] + h * p[4])
    n = jnp.tanh(x_t * p[2] + p[8] + (h * r) * p[5])
    h_t = (1.0 - z) * h + z * n
    mu = jnp.dot(x_t.astype(jnp.bfloat16), params["wmu"],
                 preferred_element_type=jnp.float32) + p[9]
    gamma = jnp.dot(delta_t.astype(jnp.bfloat16), params["wgamma"],
                    preferred_element_type=jnp.float32) + p[10]
    m = m_t.astype(jnp.bfloat16).astype(jnp.float32)
    return mu + (h_t - mu) * jnp.exp(-gamma * m)


if __name__ == "__main__":
    B, H = 8, 32          # input_size == hidden_size == 32 (required by the eye() mask)
    key = jax.random.PRNGKey(0)
    kp, kx, kh, kd, km = jax.random.split(key, 5)

    params = init_params(kp, H, H)
    x_t = jax.random.normal(kx, (B, H), jnp.float32)
    h_prev = jax.random.normal(kh, (B, H), jnp.float32)
    delta_t = jax.random.uniform(kd, (B, H), jnp.float32, 0.0, 5.0)
    m_t = (jax.random.uniform(km, (B, H)) > 0.5).astype(jnp.float32)

    out = masked_gru_cell(x_t, h_prev, delta_t, m_t, params)
    out = jax.block_until_ready(out)

    ref = masked_gru_ref(x_t, h_prev, delta_t, m_t, params)
    assert out.shape == (B, H)
    assert bool(jnp.allclose(out, ref, atol=1e-4, rtol=1e-4)), "mismatch vs reference"

    print("KERNEL_OK")
</pallas_src>

<mosaic_0001>
module attributes {stable_mosaic.version = 11 : i64} {
  func.func @_masked_gru_kernel(%arg0: i32, %arg1: memref<8x32xf32, #tpu.memory_space<vmem>>, %arg2: memref<8x32xf32, #tpu.memory_space<vmem>>, %arg3: memref<8x32xbf16, #tpu.memory_space<vmem>>, %arg4: memref<8x32xbf16, #tpu.memory_space<vmem>>, %arg5: memref<16x32xf32, #tpu.memory_space<vmem>>, %arg6: memref<32x32xbf16, #tpu.memory_space<vmem>>, %arg7: memref<32x32xbf16, #tpu.memory_space<vmem>>, %arg8: memref<8x32xf32, #tpu.memory_space<vmem>>) attributes {dimension_semantics = [#tpu.dimension_semantics<parallel>], iteration_bounds = array<i64: 1>, scalar_prefetch = 0 : i64, scratch_operands = 0 : i64, tpu.core_type = #tpu.core_type<tc>, window_params = [{transform_indices = @transform_0, window_bounds = array<i64: 8, 32>}, {transform_indices = @transform_1, window_bounds = array<i64: 8, 32>}, {transform_indices = @transform_2, window_bounds = array<i64: 8, 32>}, {transform_indices = @transform_3, window_bounds = array<i64: 8, 32>}, {pipeline_mode = #tpu.pipeline_mode<synchronous>, transform_indices = @transform_4, window_bounds = array<i64: 16, 32>}, {pipeline_mode = #tpu.pipeline_mode<synchronous>, transform_indices = @transform_5, window_bounds = array<i64: 32, 32>}, {pipeline_mode = #tpu.pipeline_mode<synchronous>, transform_indices = @transform_6, window_bounds = array<i64: 32, 32>}, {transform_indices = @transform_7, window_bounds = array<i64: 8, 32>}]} {
    %c0 = arith.constant 0 : index
    %c0_0 = arith.constant 0 : index
    %0 = vector.load %arg1[%c0, %c0_0] : memref<8x32xf32, #tpu.memory_space<vmem>>, vector<8x32xf32>
    %c0_1 = arith.constant 0 : index
    %c0_2 = arith.constant 0 : index
    %1 = vector.load %arg2[%c0_1, %c0_2] : memref<8x32xf32, #tpu.memory_space<vmem>>, vector<8x32xf32>
    %c0_3 = arith.constant 0 : index
    %c0_4 = arith.constant 0 : index
    %2 = vector.load %arg3[%c0_3, %c0_4] : memref<8x32xbf16, #tpu.memory_space<vmem>>, vector<8x32xbf16>
    %c0_5 = arith.constant 0 : index
    %c0_6 = arith.constant 0 : index
    %3 = vector.load %arg4[%c0_5, %c0_6] : memref<8x32xbf16, #tpu.memory_space<vmem>>, vector<8x32xbf16>
    %4 = arith.extf %3 : vector<8x32xbf16> to vector<8x32xf32>
    %c0_7 = arith.constant 0 : index
    %c0_8 = arith.constant 0 : index
    %5 = vector.load %arg5[%c0_7, %c0_8] : memref<16x32xf32, #tpu.memory_space<vmem>>, vector<1x32xf32>
    %c1 = arith.constant 1 : index
    %c0_9 = arith.constant 0 : index
    %6 = vector.load %arg5[%c1, %c0_9] : memref<16x32xf32, #tpu.memory_space<vmem>>, vector<1x32xf32>
    %c2 = arith.constant 2 : index
    %c0_10 = arith.constant 0 : index
    %7 = vector.load %arg5[%c2, %c0_10] : memref<16x32xf32, #tpu.memory_space<vmem>>, vector<1x32xf32>
    %c3 = arith.constant 3 : index
    %c0_11 = arith.constant 0 : index
    %8 = vector.load %arg5[%c3, %c0_11] : memref<16x32xf32, #tpu.memory_space<vmem>>, vector<1x32xf32>
    %c4 = arith.constant 4 : index
    %c0_12 = arith.constant 0 : index
    %9 = vector.load %arg5[%c4, %c0_12] : memref<16x32xf32, #tpu.memory_space<vmem>>, vector<1x32xf32>
    %c5 = arith.constant 5 : index
    %c0_13 = arith.constant 0 : index
    %10 = vector.load %arg5[%c5, %c0_13] : memref<16x32xf32, #tpu.memory_space<vmem>>, vector<1x32xf32>
    %c6 = arith.constant 6 : index
    %c0_14 = arith.constant 0 : index
    %11 = vector.load %arg5[%c6, %c0_14] : memref<16x32xf32, #tpu.memory_space<vmem>>, vector<1x32xf32>
    %c7 = arith.constant 7 : index
    %c0_15 = arith.constant 0 : index
    %12 = vector.load %arg5[%c7, %c0_15] : memref<16x32xf32, #tpu.memory_space<vmem>>, vector<1x32xf32>
    %c8 = arith.constant 8 : index
    %c0_16 = arith.constant 0 : index
    %13 = vector.load %arg5[%c8, %c0_16] : memref<16x32xf32, #tpu.memory_space<vmem>>, vector<1x32xf32>
    %c9 = arith.constant 9 : index
    %c0_17 = arith.constant 0 : index
    %14 = vector.load %arg5[%c9, %c0_17] : memref<16x32xf32, #tpu.memory_space<vmem>>, vector<1x32xf32>
    %c10 = arith.constant 10 : index
    %c0_18 = arith.constant 0 : index
    %15 = vector.load %arg5[%c10, %c0_18] : memref<16x32xf32, #tpu.memory_space<vmem>>, vector<1x32xf32>
    %16 = vector.broadcast %5 : vector<1x32xf32> to vector<8x32xf32>
    %17 = arith.mulf %0, %16 : vector<8x32xf32>
    %18 = vector.broadcast %11 : vector<1x32xf32> to vector<8x32xf32>
    %19 = arith.addf %17, %18 : vector<8x32xf32>
    %20 = vector.broadcast %8 : vector<1x32xf32> to vector<8x32xf32>
    %21 = arith.mulf %1, %20 : vector<8x32xf32>
    %22 = arith.addf %19, %21 : vector<8x32xf32>
    %23 = arith.negf %22 : vector<8x32xf32>
    %24 = math.exp %23 : vector<8x32xf32>
    %cst = arith.constant 1.000000e+00 : f32
    %25 = vector.broadcast %cst : f32 to vector<8x32xf32>
    %26 = arith.addf %25, %24 : vector<8x32xf32>
    %27 = arith.divf %25, %26 : vector<8x32xf32>
    %28 = vector.broadcast %6 : vector<1x32xf32> to vector<8x32xf32>
    %29 = arith.mulf %0, %28 : vector<8x32xf32>
    %30 = vector.broadcast %12 : vector<1x32xf32> to vector<8x32xf32>
    %31 = arith.addf %29, %30 : vector<8x32xf32>
    %32 = vector.broadcast %9 : vector<1x32xf32> to vector<8x32xf32>
    %33 = arith.mulf %1, %32 : vector<8x32xf32>
    %34 = arith.addf %31, %33 : vector<8x32xf32>
    %35 = arith.negf %34 : vector<8x32xf32>
    %36 = math.exp %35 : vector<8x32xf32>
    %cst_19 = arith.constant 1.000000e+00 : f32
    %37 = vector.broadcast %cst_19 : f32 to vector<8x32xf32>
    %38 = arith.addf %37, %36 : vector<8x32xf32>
    %39 = arith.divf %37, %38 : vector<8x32xf32>
    %40 = vector.broadcast %7 : vector<1x32xf32> to vector<8x32xf32>
    %41 = arith.mulf %0, %40 : vector<8x32xf32>
    %42 = vector.broadcast %13 : vector<1x32xf32> to vector<8x32xf32>
    %43 = arith.addf %41, %42 : vector<8x32xf32>
    %44 = arith.mulf %1, %27 : vector<8x32xf32>
    %45 = vector.broadcast %10 : vector<1x32xf32> to vector<8x32xf32>
    %46 = arith.mulf %44, %45 : vector<8x32xf32>
    %47 = arith.addf %43, %46 : vector<8x32xf32>
    %48 = math.tanh %47 : vector<8x32xf32>
    %cst_20 = arith.constant 1.000000e+00 : f32
    %49 = vector.broadcast %cst_20 : f32 to vector<8x32xf32>
    %50 = arith.subf %49, %39 : vector<8x32xf32>
    %51 = arith.mulf %50, %1 : vector<8x32xf32>
    %52 = arith.mulf %39, %48 : vector<8x32xf32>
    %53 = arith.addf %51, %52 : vector<8x32xf32>
    %54 = arith.truncf %0 : vector<8x32xf32> to vector<8x32xbf16>
    %c0_21 = arith.constant 0 : index
    %c0_22 = arith.constant 0 : index
    %55 = vector.load %arg6[%c0_21, %c0_22] : memref<32x32xbf16, #tpu.memory_space<vmem>>, vector<32x32xbf16>
    %cst_23 = arith.constant dense<0.000000e+00> : vector<8x32xf32>
    %56 = tpu.matmul %54, %55, %cst_23 {dimension_numbers = #tpu.dot_dimension_numbers<[1], [0], [0], [1], [0, 0, 1, 1], [], []>} : vector<8x32xbf16>, vector<32x32xbf16>, vector<8x32xf32> -> vector<8x32xf32>
    %57 = vector.broadcast %14 : vector<1x32xf32> to vector<8x32xf32>
    %58 = arith.addf %56, %57 : vector<8x32xf32>
    %c0_24 = arith.constant 0 : index
    %c0_25 = arith.constant 0 : index
    %59 = vector.load %arg7[%c0_24, %c0_25] : memref<32x32xbf16, #tpu.memory_space<vmem>>, vector<32x32xbf16>
    %cst_26 = arith.constant dense<0.000000e+00> : vector<8x32xf32>
    %60 = tpu.matmul %2, %59, %cst_26 {dimension_numbers = #tpu.dot_dimension_numbers<[1], [0], [0], [1], [0, 0, 1, 1], [], []>} : vector<8x32xbf16>, vector<32x32xbf16>, vector<8x32xf32> -> vector<8x32xf32>
    %61 = vector.broadcast %15 : vector<1x32xf32> to vector<8x32xf32>
    %62 = arith.addf %60, %61 : vector<8x32xf32>
    %63 = arith.subf %53, %58 : vector<8x32xf32>
    %cst_27 = arith.constant 0.000000e+00 : f32
    %64 = vector.broadcast %cst_27 : f32 to vector<8x32xf32>
    %65 = arith.subf %64, %62 : vector<8x32xf32>
    %66 = arith.mulf %65, %4 : vector<8x32xf32>
    %67 = math.exp %66 : vector<8x32xf32>
    %68 = arith.mulf %63, %67 : vector<8x32xf32>
    %69 = arith.addf %58, %68 : vector<8x32xf32>
    %c0_28 = arith.constant 0 : index
    %c0_29 = arith.constant 0 : index
    %70 = vector.load %arg8[%c0_28, %c0_29] : memref<8x32xf32, #tpu.memory_space<vmem>>, vector<8x32xf32>
    tpu.vector_store %arg8[%c0_28, %c0_29], %69 {strides = array<i32>} : memref<8x32xf32, #tpu.memory_space<vmem>>, vector<8x32xf32>,
    return
  }
  func.func @transform_0(%arg0: i32) -> (i32, i32) {
    %c0_i32 = arith.constant 0 : i32
    %c0_i32_0 = arith.constant 0 : i32
    return %arg0, %c0_i32 : i32, i32
  }
  func.func @transform_1(%arg0: i32) -> (i32, i32) {
    %c0_i32 = arith.constant 0 : i32
    %c0_i32_0 = arith.constant 0 : i32
    return %arg0, %c0_i32 : i32, i32
  }
  func.func @transform_2(%arg0: i32) -> (i32, i32) {
    %c0_i32 = arith.constant 0 : i32
    %c0_i32_0 = arith.constant 0 : i32
    return %arg0, %c0_i32 : i32, i32
  }
  func.func @transform_3(%arg0: i32) -> (i32, i32) {
    %c0_i32 = arith.constant 0 : i32
    %c0_i32_0 = arith.constant 0 : i32
    return %arg0, %c0_i32 : i32, i32
  }
  func.func @transform_4(%arg0: i32) -> (i32, i32) {
    %c0_i32 = arith.constant 0 : i32
    %c0_i32_0 = arith.constant 0 : i32
    %c0_i32_1 = arith.constant 0 : i32
    return %c0_i32, %c0_i32_0 : i32, i32
  }
  func.func @transform_5(%arg0: i32) -> (i32, i32) {
    %c0_i32 = arith.constant 0 : i32
    %c0_i32_0 = arith.constant 0 : i32
    %c0_i32_1 = arith.constant 0 : i32
    return %c0_i32, %c0_i32_0 : i32, i32
  }
  func.func @transform_6(%arg0: i32) -> (i32, i32) {
    %c0_i32 = arith.constant 0 : i32
    %c0_i32_0 = arith.constant 0 : i32
    %c0_i32_1 = arith.constant 0 : i32
    return %c0_i32, %c0_i32_0 : i32, i32
  }
  func.func @transform_7(%arg0: i32) -> (i32, i32) {
    %c0_i32 = arith.constant 0 : i32
    %c0_i32_0 = arith.constant 0 : i32
    return %arg0, %c0_i32 : i32, i32
  }
}

</mosaic_0001>

<llo_original>
// kernel: masked_gru_cell.1
$region0: #{masked_gru_cell.1}
  #allocation0 [shape = 'u32[]', space=smem, size = 0x4, offset = 0x4, fixed_abs, tag = 'smem constant byte address 0x4 - core index']
  #allocation1 [shape = 'u32[72,128]{1,0:T(1,128)}', space=vmem, size = 0x9000, scoped, tag = 'internal scratch']
  %s0 = inlined_call_operand.hbm [shape: f32[8,32], index: 0, kind: input, shape index: {}]
  %s1 = inlined_call_operand.hbm [shape: f32[8,32], index: 1, kind: input, shape index: {}]
  %s2 = inlined_call_operand.vmem [shape: bf16[8,32], index: 2, kind: input, shape index: {}]
  %s3 = inlined_call_operand.vmem [shape: bf16[8,32], index: 3, kind: input, shape index: {}]
  %s4 = inlined_call_operand.vmem [shape: f32[16,32], index: 4, kind: input, shape index: {}]
  %s5 = inlined_call_operand.hbm [shape: bf16[32,32], index: 5, kind: input, shape index: {}]
  %s6 = inlined_call_operand.hbm [shape: bf16[32,32], index: 6, kind: input, shape index: {}]
  %s7 = inlined_call_operand.hbm [shape: f32[8,32], index: 7, kind: output, shape index: {}]
  %s8 = sld [smem:[#allocation0]]
  $region54: #{masked_gru_cell.1} parent=0
    _
  %s10 = ssub.s32 1, %s8
  %s11 = scalar_select 0, %s10, %s8
  $region1: #{masked_gru_cell.1} parent=0
    #allocation2 [shape = 'u8[4096]{0}', space=vmem, size = 0x1000, scoped, tag = 'input window, operand 0, single buffered']
    #allocation3 [shape = 's32[1]{0}', space=sflag, size = 0x4, scoped, tag = 'scoped memory for masked_gru_cell.1']
    #allocation4 [shape = 's32[1]{0}', space=sflag, size = 0x4, scoped, tag = 'scoped memory for masked_gru_cell.1']
    #allocation5 [shape = 'u8[4096]{0}', space=vmem, size = 0x1000, scoped, tag = 'input window, operand 1, single buffered']
    #allocation6 [shape = 's32[1]{0}', space=sflag, size = 0x4, scoped, tag = 'scoped memory for masked_gru_cell.1']
    #allocation7 [shape = 'u8[8192]{0}', space=vmem, size = 0x2000, scoped, tag = 'input window, operand 5, single buffered']
    #allocation8 [shape = 'u8[8192]{0}', space=vmem, size = 0x2000, scoped, tag = 'input window, operand 6, single buffered']
    #allocation9 [shape = 's32[1]{0}', space=sflag, size = 0x4, scoped, tag = 'scoped memory for masked_gru_cell.1']
    #allocation10 [shape = 'u8[4096]{0}', space=vmem, size = 0x1000, scoped, tag = 'output window, operand 0, single buffered']
    %12 = vsyncpa [#allocation3], 0
    %13 = vsyncpa [#allocation6], 0
    %14 = vsyncpa [#allocation9], 0
    %15 = vsyncpa [#allocation4], 0
    // Predicated region
    $region2: #{masked_gru_cell.1} parent=1 // pred_check
      _
    $region3: #{masked_gru_cell.1} parent=1 // pred_check_branch
      %17 = sbr.rel (0) target = $region5
    $region4: #{masked_gru_cell.1} parent=1 // pred_region
      %19 = vsyncadd [#allocation3], 0
      %s21 = sshll.u32 %s0, 4
      %s22 = int_to_ptr.hbm [resolvable:$true] %s21
      %s23 = sshll.u32 [#allocation2], 4
      %s24 = int_to_ptr.vmem [resolvable:$true] %s23
      %26 = dma.hbm_to_vmem [thread:$0]  %s22, 128, %s24, [#allocation3]
    $region5: #{masked_gru_cell.1} parent=1 // pred_fallthru
      _
    // Predicated region
    $region6: #{masked_gru_cell.1} parent=1 // pred_check
      _
    $region7: #{masked_gru_cell.1} parent=1 // pred_check_branch
      %28 = sbr.rel (0) target = $region9
    $region8: #{masked_gru_cell.1} parent=1 // pred_region
      %30 = vsyncadd [#allocation6], 0
      %s32 = sshll.u32 %s1, 4
      %s33 = int_to_ptr.hbm [resolvable:$true] %s32
      %s34 = sshll.u32 [#allocation5], 4
      %s35 = int_to_ptr.vmem [resolvable:$true] %s34
      %37 = dma.hbm_to_vmem [thread:$0]  %s33, 128, %s35, [#allocation6]
    $region9: #{masked_gru_cell.1} parent=1 // pred_fallthru
      _
    // Predicated region
    $region10: #{masked_gru_cell.1} parent=1 // pred_check
      _
    $region11: #{masked_gru_cell.1} parent=1 // pred_check_branch
      %39 = sbr.rel (0) target = $region13
    $region12: #{masked_gru_cell.1} parent=1 // pred_region
      _
    $region13: #{masked_gru_cell.1} parent=1 // pred_fallthru
      _
    // Predicated region
    $region14: #{masked_gru_cell.1} parent=1 // pred_check
      _
    $region15: #{masked_gru_cell.1} parent=1 // pred_check_branch
      %41 = sbr.rel (0) target = $region17
    $region16: #{masked_gru_cell.1} parent=1 // pred_region
      _
    $region17: #{masked_gru_cell.1} parent=1 // pred_fallthru
      _
    // Predicated region
    $region18: #{masked_gru_cell.1} parent=1 // pred_check
      _
    $region19: #{masked_gru_cell.1} parent=1 // pred_check_branch
      %43 = sbr.rel (0) target = $region21
    $region20: #{masked_gru_cell.1} parent=1 // pred_region
      _
    $region21: #{masked_gru_cell.1} parent=1 // pred_fallthru
      _
    // Predicated region
    $region22: #{masked_gru_cell.1} parent=1 // pred_check
      _
    $region23: #{masked_gru_cell.1} parent=1 // pred_check_branch
      %45 = sbr.rel (0) target = $region25
    $region24: #{masked_gru_cell.1} parent=1 // pred_region
      %47 = vsyncadd [#allocation6], 0
      %s48 = sshll.u32 %s5, 4
      %s49 = int_to_ptr.hbm [resolvable:$true] %s48
      %s50 = sshll.u32 [#allocation7], 4
      %s51 = int_to_ptr.vmem [resolvable:$true] %s50
      %56 = dma.hbm_to_vmem [thread:$0]  %s49, 256, %s51, [#allocation6], 64, 64, 4
    $region25: #{masked_gru_cell.1} parent=1 // pred_fallthru
      _
    // Predicated region
    $region26: #{masked_gru_cell.1} parent=1 // pred_check
      _
    $region27: #{masked_gru_cell.1} parent=1 // pred_check_branch
      %58 = sbr.rel (0) target = $region29
    $region28: #{masked_gru_cell.1} parent=1 // pred_region
      %60 = vsyncadd [#allocation9], 0
      %s61 = sshll.u32 %s6, 4
      %s62 = int_to_ptr.hbm [resolvable:$true] %s61
      %s63 = sshll.u32 [#allocation8], 4
      %s64 = int_to_ptr.vmem [resolvable:$true] %s63
      %69 = dma.hbm_to_vmem [thread:$0]  %s62, 256, %s64, [#allocation9], 64, 64, 4
    $region29: #{masked_gru_cell.1} parent=1 // pred_fallthru
      _
    // Predicated region
    $region30: #{masked_gru_cell.1} parent=1 // pred_check
      _
    $region31: #{masked_gru_cell.1} parent=1 // pred_check_branch
      %71 = sbr.rel (0) target = $region33
    $region32: #{masked_gru_cell.1} parent=1 // pred_region
      %73 = dma.done [#allocation3], 128
    $region33: #{masked_gru_cell.1} parent=1 // pred_fallthru
      _
    // Predicated region
    $region34: #{masked_gru_cell.1} parent=1 // pred_check
      _
    $region35: #{masked_gru_cell.1} parent=1 // pred_check_branch
      %75 = sbr.rel (0) target = $region37
    $region36: #{masked_gru_cell.1} parent=1 // pred_region
      %77 = dma.done [#allocation6], 128
    $region37: #{masked_gru_cell.1} parent=1 // pred_fallthru
      _
    // Predicated region
    $region38: #{masked_gru_cell.1} parent=1 // pred_check
      _
    $region39: #{masked_gru_cell.1} parent=1 // pred_check_branch
      %79 = sbr.rel (0) target = $region41
    $region40: #{masked_gru_cell.1} parent=1 // pred_region
      %81 = dma.done [#allocation6], 256
    $region41: #{masked_gru_cell.1} parent=1 // pred_fallthru
      _
    // Predicated region
    $region42: #{masked_gru_cell.1} parent=1 // pred_check
      _
    $region43: #{masked_gru_cell.1} parent=1 // pred_check_branch
      %83 = sbr.rel (0) target = $region45
    $region44: #{masked_gru_cell.1} parent=1 // pred_region
      %85 = dma.done [#allocation9], 256
    $region45: #{masked_gru_cell.1} parent=1 // pred_fallthru
      _
    %v87 = vld [vmem:[#allocation2] sm:$0xff]
    %v88 = vld [vmem:[#allocation5] sm:$0xff]
    %v89 = vld [vmem:[%s2] sm:$0xf]
    %v90 = vld [vmem:[%s3] sm:$0xf]
    %v91 = vunpack.c.l.bf16 %v90
    %v92 = vld [vmem:[%s4] sm:$0x1]
    %v93 = vld [vmem:[%s4 + $0x1] sm:$0x1]
    %v94 = vld [vmem:[%s4 + $0x2] sm:$0x1]
    %v95 = vld [vmem:[%s4 + $0x3] sm:$0x1]
    %v96 = vld [vmem:[%s4 + $0x4] sm:$0x1]
    %v97 = vld [vmem:[%s4 + $0x5] sm:$0x1]
    %v98 = vld [vmem:[%s4 + $0x6] sm:$0x1]
    %v99 = vld [vmem:[%s4 + $0x7] sm:$0x1]
    %v100 = vld [vmem:[%s4 + $0x8] sm:$0x1]
    %v101 = vld [vmem:[%s4 + $0x9] sm:$0x1]
    %v102 = vld [vmem:[%s4 + $0xa] sm:$0x1]
    %v103 = vperm.slane %v92, 0
    %v104 = vmul.f32 %v87, %v103
    %v105 = vperm.slane %v98, 0
    %v106 = vadd.f32 %v104, %v105
    %v107 = vperm.slane %v95, 0
    %v108 = vmul.f32 %v88, %v107
    %v109 = vadd.f32 %v106, %v108
    %v110 = vxor.u32 %v109, 2147483648
    %v111 = vmul.f32 %v110, 1.442695
    %v112 = vpow.pop %v111
    %v113 = vadd.f32 %v112, 1.0
    %v114 = vrcp.pop %v113
    %v115 = vmul.f32 %v113, %v114
    %v116 = vsub.f32 1.0, %v115
    %v117 = vmul.f32 %v114, %v116
    %v118 = vadd.f32 %v114, %v117
    %vm119 = vweird.f32 %v113
    %vm120 = vweird.f32 %v114
    %vm121 = vmor %vm119, %vm120
    %v122 = vsel %vm121, %v114, %v118
    %v123 = vand.u32 2147483647, %v113
    %vm124 = vcmp.eq.f32.partialorder %v123, 8.507059e+37
    %v125 = vand.u32 %v113, 2147483648
    %v126 = vor.u32 1.1754944e-38, %v125
    %v127 = vsel %vm124, %v126, %v122
    %v128 = vmul.f32 1.0, %v127
    %v129 = vperm.slane %v93, 0
    %v130 = vmul.f32 %v87, %v129
    %v131 = vperm.slane %v99, 0
    %v132 = vadd.f32 %v130, %v131
    %v133 = vperm.slane %v96, 0
    %v134 = vmul.f32 %v88, %v133
    %v135 = vadd.f32 %v132, %v134
    %v136 = vxor.u32 %v135, 2147483648
    %v137 = vmul.f32 %v136, 1.442695
    %v138 = vpow.pop %v137
    %v139 = vadd.f32 %v138, 1.0
    %v140 = vrcp.pop %v139
    %v141 = vmul.f32 %v139, %v140
    %v142 = vsub.f32 1.0, %v141
    %v143 = vmul.f32 %v140, %v142
    %v144 = vadd.f32 %v140, %v143
    %vm145 = vweird.f32 %v139
    %vm146 = vweird.f32 %v140
    %vm147 = vmor %vm145, %vm146
    %v148 = vsel %vm147, %v140, %v144
    %v149 = vand.u32 2147483647, %v139
    %vm150 = vcmp.eq.f32.partialorder %v149, 8.507059e+37
    %v151 = vand.u32 %v139, 2147483648
    %v152 = vor.u32 1.1754944e-38, %v151
    %v153 = vsel %vm150, %v152, %v148
    %v154 = vmul.f32 1.0, %v153
    %v155 = vperm.slane %v94, 0
    %v156 = vmul.f32 %v87, %v155
    %v157 = vperm.slane %v100, 0
    %v158 = vadd.f32 %v156, %v157
    %v159 = vmul.f32 %v88, %v128
    %v160 = vperm.slane %v97, 0
    %v161 = vmul.f32 %v159, %v160
    %v162 = vadd.f32 %v158, %v161
    %v163 = vtanh.pop %v162
    %v164 = vsub.f32 1.0, %v154
    %v165 = vmul.f32 %v164, %v88
    %v166 = vmul.f32 %v154, %v163
    %v167 = vadd.f32 %v165, %v166
    %v168 = vpack.c.bf16 %v87, %v87
    %v169 = vld [vmem:[#allocation7] sm:$0xf]
    %v170 = vld [vmem:[#allocation7 + $0x4] sm:$0xf]
    %v171 = vld [vmem:[#allocation7 + $0x8] sm:$0xf]
    %v172 = vld [vmem:[#allocation7 + $0xc] sm:$0xf]
    %v173 = vperm.slane %v101, 0
    %v178 = vunpack.c.l.b16 %v169
    %v179 = vunpack.c.l.b16 %v170
    %v180 = vunpack.c.l.b16 %v171
    %v181 = vunpack.c.l.b16 %v172
    %v182 = vpack.c.b16 %v179, %v178
    %v183 = vpack.c.b16 %v181, %v180
    %vm186 = vcmask 261120
    %v188 = vsel %vm186, %v168, 0
    %190 = vmatpush.bf16.msra.mxu0 0
    %191 = vmatpush.bf16.msra.mxu0 0
    %192 = vmatpush.bf16.msra.mxu0 0
    %193 = vmatpush.bf16.msra.mxu0 0
    %194 = vmatpush.bf16.msra.mxu0 0
    %195 = vmatpush.bf16.msra.mxu0 0
    %196 = vmatpush.bf16.msra.mxu0 %v183
    %197 = vmatpush.bf16.msra.mxu0 %v182
    %198 = vmatmul.bf16.gmra.mxu0 %v188
    %v199 = vpop.f32.mrf.mxu0
    %v200 = vadd.f32 %v173, %v199
    %v201 = vpop.f32.mrf.mxu0
    %202 = vdwg.mxu0
    %v203 = vld [vmem:[#allocation8] sm:$0xf]
    %v204 = vld [vmem:[#allocation8 + $0x4] sm:$0xf]
    %v205 = vld [vmem:[#allocation8 + $0x8] sm:$0xf]
    %v206 = vld [vmem:[#allocation8 + $0xc] sm:$0xf]
    %v207 = vperm.slane %v102, 0
    %v212 = vunpack.c.l.b16 %v203
    %v213 = vunpack.c.l.b16 %v204
    %v214 = vunpack.c.l.b16 %v205
    %v215 = vunpack.c.l.b16 %v206
    %v216 = vpack.c.b16 %v213, %v212
    %v217 = vpack.c.b16 %v215, %v214
    %v221 = vsel %vm186, %v89, 0
    %223 = vmatpush.bf16.msra.mxu0 0
    %224 = vmatpush.bf16.msra.mxu0 0
    %225 = vmatpush.bf16.msra.mxu0 0
    %226 = vmatpush.bf16.msra.mxu0 0
    %227 = vmatpush.bf16.msra.mxu0 0
    %228 = vmatpush.bf16.msra.mxu0 0
    %229 = vmatpush.bf16.msra.mxu0 %v217
    %230 = vmatpush.bf16.msra.mxu0 %v216
    %231 = vmatmul.bf16.gmra.mxu0 %v221
    %v232 = vpop.f32.mrf.mxu0
    %v233 = vadd.f32 %v207, %v232
    %v234 = vpop.f32.mrf.mxu0
    %235 = vdwg.mxu0
    %v236 = vsub.f32 %v167, %v200
    %v237 = vsub.f32 0.0, %v233
    %v238 = vmul.f32 %v237, %v91
    %v239 = vmul.f32 %v238, 1.442695
    %v240 = vpow.pop %v239
    %v241 = vmul.f32 %v236, %v240
    %v242 = vadd.f32 %v200, %v241
    %243 = vst.msk [vmem:[#allocation10] sm:$0xff] %vm186, %v242
    // Predicated region
    $region46: #{masked_gru_cell.1} parent=1 // pred_check
      _
    $region47: #{masked_gru_cell.1} parent=1 // pred_check_branch
      %245 = sbr.rel (0) target = $region49
    $region48: #{masked_gru_cell.1} parent=1 // pred_region
      %247 = vsyncadd [#allocation4], 0
      %s249 = sshll.u32 [#allocation10], 4
      %s250 = int_to_ptr.vmem [resolvable:$true] %s249
      %s251 = sshll.u32 %s7, 4
      %s252 = int_to_ptr.hbm [resolvable:$true] %s251
      %254 = dma.vmem_to_hbm [thread:$0]  %s250, 128, %s252, [#allocation4]
    $region49: #{masked_gru_cell.1} parent=1 // pred_fallthru
      _
    // Predicated region
    $region50: #{masked_gru_cell.1} parent=1 // pred_check
      _
    $region51: #{masked_gru_cell.1} parent=1 // pred_check_branch
      %256 = sbr.rel (0) target = $region53
    $region52: #{masked_gru_cell.1} parent=1 // pred_region
      %258 = dma.done [#allocation4], 128
    $region53: #{masked_gru_cell.1} parent=1 // pred_fallthru
      _
    %259 = vsyncpa [#allocation3], 1
    %260 = vsyncpa [#allocation6], 1
    %261 = vsyncpa [#allocation9], 1
    %262 = vsyncpa [#allocation4], 1

</llo_original>
